<compile_context>
chip_gen: v6e
topology: v6e:2x2x1
jax: 0.10.0
libtpu: 0.0.40
codegen_flags: <defaults>
</compile_context>

<pallas_src>
import functools

import jax
import jax.numpy as jnp
from jax.experimental import pallas as pl
from jax.experimental.pallas import tpu as pltpu

LANE = 128


def _round_up(x, m):
    return (x + m - 1) // m * m


# ---------------------------------------------------------------------------
# Kernels
# ---------------------------------------------------------------------------
def mm_kernel(x_ref, w_ref, o_ref):
    """Row-tiled dense feature transform: o_tile = x_tile @ w (f32 accumulate)."""
    o_ref[...] = jnp.dot(
        x_ref[...], w_ref[...], preferred_element_type=jnp.float32
    ).astype(o_ref.dtype)


def agg_relu_kernel(a_ref, m_ref, b_ref, o_ref):
    """o_tile = relu(a_tile @ m + b); epilogue in f32."""
    acc = jnp.dot(a_ref[...], m_ref[...], preferred_element_type=jnp.float32)
    acc = acc + b_ref[...]
    o_ref[...] = jnp.maximum(acc, 0.0).astype(o_ref.dtype)


def agg_logsoftmax_kernel(a_ref, m_ref, b_ref, o_ref, *, num_classes):
    """o_tile = log_softmax(a_tile @ m + b, axis=1) with padded class lanes masked."""
    logits = jnp.dot(a_ref[...], m_ref[...], preferred_element_type=jnp.float32)
    logits = logits + b_ref[...]
    lane_idx = jax.lax.broadcasted_iota(jnp.int32, logits.shape, 1)
    logits = jnp.where(lane_idx < num_classes, logits, jnp.float32(-1e30))
    m = jnp.max(logits, axis=1, keepdims=True)
    z = logits - m
    lse = jnp.log(jnp.sum(jnp.exp(z), axis=1, keepdims=True))
    o_ref[...] = (z - lse).astype(o_ref.dtype)


# ---------------------------------------------------------------------------
# pallas_call wrappers
# ---------------------------------------------------------------------------
def _compiler_params(row_tile, k_max):
    vmem_bytes = (
        2 * row_tile * k_max * 2      # double-buffered lhs row tile (bf16)
        + k_max * LANE * 2            # resident rhs (bf16)
        + 2 * row_tile * LANE * 4     # double-buffered output tile (f32 worst case)
        + LANE * 4                    # bias
        + (4 << 20)                   # slack
    )
    vmem_bytes = int(min(max(vmem_bytes, 16 << 20), 48 << 20))
    return pltpu.CompilerParams(
        dimension_semantics=("parallel",),
        vmem_limit_bytes=vmem_bytes,
    )


def _row_tiled_mm(x, w, out_dtype, row_tile, compiler_params):
    n_pad, k = x.shape
    m = w.shape[1]
    return pl.pallas_call(
        mm_kernel,
        out_shape=jax.ShapeDtypeStruct((n_pad, m), out_dtype),
        grid_spec=pltpu.PrefetchScalarGridSpec(
            num_scalar_prefetch=0,
            grid=(n_pad // row_tile,),
            in_specs=[
                pl.BlockSpec((row_tile, k), lambda i: (i, 0)),
                pl.BlockSpec((k, m), lambda i: (0, 0)),
            ],
            out_specs=pl.BlockSpec((row_tile, m), lambda i: (i, 0)),
        ),
        compiler_params=compiler_params,
    )(x, w)


def _row_tiled_aggregate(kernel, a, m, b, out_dtype, row_tile, compiler_params):
    n_pad = a.shape[0]
    lane_w = m.shape[1]
    return pl.pallas_call(
        kernel,
        out_shape=jax.ShapeDtypeStruct((n_pad, lane_w), out_dtype),
        grid_spec=pltpu.PrefetchScalarGridSpec(
            num_scalar_prefetch=0,
            grid=(n_pad // row_tile,),
            in_specs=[
                pl.BlockSpec((row_tile, n_pad), lambda i: (i, 0)),  # stream A rows
                pl.BlockSpec((n_pad, lane_w), lambda i: (0, 0)),    # resident XW
                pl.BlockSpec((1, lane_w), lambda i: (0, 0)),        # bias
            ],
            out_specs=pl.BlockSpec((row_tile, lane_w), lambda i: (i, 0)),
        ),
        compiler_params=compiler_params,
    )(a, m, b)


def _pad_to(a, rows, cols, dtype):
    out = jnp.zeros((rows, cols), dtype)
    return out.at[: a.shape[0], : a.shape[1]].set(a.astype(dtype))


def gcn_forward(a_hat, x, w1, b1, w2, b2, *, row_tile=None):
    n, f_in = x.shape
    hidden = w1.shape[1]
    num_classes = w2.shape[1]

    f_pad = _round_up(f_in, LANE)
    h_pad = _round_up(hidden, LANE)
    c_pad = _round_up(num_classes, LANE)

    if row_tile is None:
        row_tile = 256 if n >= 256 else _round_up(n, 8)
    n_pad = _round_up(n, row_tile)

    # ---- padding / dtype staging (plain-JAX glue) ----
    a_p = _pad_to(a_hat, n_pad, n_pad, jnp.bfloat16)   # DMA-bound operand -> bf16
    x_p = _pad_to(x, n_pad, f_pad, jnp.bfloat16)
    w1_p = _pad_to(w1, f_pad, h_pad, jnp.bfloat16)
    w2_p = _pad_to(w2, h_pad, c_pad, jnp.bfloat16)
    b1_p = _pad_to(b1.reshape(1, -1), 1, h_pad, jnp.float32)
    b2_p = _pad_to(b2.reshape(1, -1), 1, c_pad, jnp.float32)

    params = _compiler_params(row_tile, max(n_pad, f_pad, h_pad))

    # ---- Layer 1: XW1 once, then stream A_hat row tiles; ReLU fused ----
    xw1 = _row_tiled_mm(x_p, w1_p, jnp.bfloat16, row_tile, params)
    h = _row_tiled_aggregate(agg_relu_kernel, a_p, xw1, b1_p,
                             jnp.bfloat16, row_tile, params)

    # dropout: identity in eval mode

    # ---- Layer 2: HW2 once, then stream A_hat row tiles; log_softmax fused ----
    hw2 = _row_tiled_mm(h, w2_p, jnp.bfloat16, row_tile, params)
    kernel2 = functools.partial(agg_logsoftmax_kernel, num_classes=num_classes)
    out_p = _row_tiled_aggregate(kernel2, a_p, hw2, b2_p,
                                 jnp.float32, row_tile, params)

    return out_p[:n, :num_classes]


# ---------------------------------------------------------------------------
# Plain-JAX glue / reference
# ---------------------------------------------------------------------------
def build_normalized_adjacency(edge_index, num_nodes):
    """Dense A_hat = D^{-1/2} (A + I) D^{-1/2} from a (2, E) edge_index."""
    src, dst = edge_index[0], edge_index[1]
    adj = jnp.zeros((num_nodes, num_nodes), jnp.float32)
    adj = adj.at[dst, src].set(1.0)                      # row = target, col = source
    adj = adj + jnp.eye(num_nodes, dtype=jnp.float32)    # self-loops
    adj = jnp.minimum(adj, 1.0)                          # dedup repeated edges
    deg = jnp.sum(adj, axis=1)
    dinv = jnp.where(deg > 0, 1.0 / jnp.sqrt(deg), 0.0)
    return dinv[:, None] * adj * dinv[None, :]


def reference_forward(a_hat, x, w1, b1, w2, b2):
    h = jnp.maximum(a_hat @ (x @ w1) + b1, 0.0)
    logits = a_hat @ (h @ w2) + b2
    return jax.nn.log_softmax(logits, axis=1)


if __name__ == "__main__":
    key = jax.random.PRNGKey(0)
    k_x, k_e, k_w1, k_w2 = jax.random.split(key, 4)

    # Small synthetic "Cora-like" graph.
    num_nodes = 16
    num_features = 8     # dataset.num_node_features
    hidden = 16
    num_classes = 4      # dataset.num_classes
    num_edges = 20       # undirected edges -> 40 directed entries

    x = jax.random.normal(k_x, (num_nodes, num_features), jnp.float32)

    e = jax.random.randint(k_e, (2, num_edges), 0, num_nodes)
    edge_index = jnp.concatenate([e, e[::-1]], axis=1)   # symmetric (undirected)

    a_hat = build_normalized_adjacency(edge_index, num_nodes)

    def glorot(k, shape):
        lim = (6.0 / (shape[0] + shape[1])) ** 0.5
        return jax.random.uniform(k, shape, jnp.float32, -lim, lim)

    w1 = glorot(k_w1, (num_features, hidden))
    b1 = jnp.zeros((1, hidden), jnp.float32)
    w2 = glorot(k_w2, (hidden, num_classes))
    b2 = jnp.zeros((1, num_classes), jnp.float32)

    out = gcn_forward(a_hat, x, w1, b1, w2, b2)
    out = jax.block_until_ready(out)

    ref = reference_forward(a_hat, x, w1, b1, w2, b2)
    assert out.shape == (num_nodes, num_classes)
    # bf16 matmul operands -> relaxed tolerance vs. the f32 reference
    assert jnp.allclose(out, ref, atol=5e-2, rtol=5e-2), float(jnp.max(jnp.abs(out - ref)))
    # rows of exp(log_softmax) must sum to 1 (padded class lanes correctly masked)
    assert jnp.allclose(jnp.sum(jnp.exp(out), axis=1), 1.0, atol=1e-3)

    print("KERNEL_OK")
</pallas_src>

<mosaic_0001>
module attributes {stable_mosaic.version = 11 : i64} {
  func.func @mm_kernel(%arg0: i32, %arg1: memref<16x128xbf16, #tpu.memory_space<vmem>>, %arg2: memref<128x128xbf16, #tpu.memory_space<vmem>>, %arg3: memref<16x128xbf16, #tpu.memory_space<vmem>>) attributes {dimension_semantics = [#tpu.dimension_semantics<parallel>], iteration_bounds = array<i64: 1>, scalar_prefetch = 0 : i64, scratch_operands = 0 : i64, tpu.core_type = #tpu.core_type<tc>, window_params = [{transform_indices = @transform_0, window_bounds = array<i64: 16, 128>}, {pipeline_mode = #tpu.pipeline_mode<synchronous>, transform_indices = @transform_1, window_bounds = array<i64: 128, 128>}, {transform_indices = @transform_2, window_bounds = array<i64: 16, 128>}]} {
    %c0 = arith.constant 0 : index
    %c0_0 = arith.constant 0 : index
    %0 = vector.load %arg1[%c0, %c0_0] : memref<16x128xbf16, #tpu.memory_space<vmem>>, vector<16x128xbf16>
    %c0_1 = arith.constant 0 : index
    %c0_2 = arith.constant 0 : index
    %1 = vector.load %arg2[%c0_1, %c0_2] : memref<128x128xbf16, #tpu.memory_space<vmem>>, vector<128x128xbf16>
    %cst = arith.constant dense<0.000000e+00> : vector<16x128xf32>
    %2 = tpu.matmul %0, %1, %cst {dimension_numbers = #tpu.dot_dimension_numbers<[1], [0], [0], [1], [0, 0, 1, 1], [], []>} : vector<16x128xbf16>, vector<128x128xbf16>, vector<16x128xf32> -> vector<16x128xf32>
    %3 = arith.truncf %2 : vector<16x128xf32> to vector<16x128xbf16>
    %c0_3 = arith.constant 0 : index
    %c0_4 = arith.constant 0 : index
    %4 = vector.load %arg3[%c0_3, %c0_4] : memref<16x128xbf16, #tpu.memory_space<vmem>>, vector<16x128xbf16>
    tpu.vector_store %arg3[%c0_3, %c0_4], %3 {strides = array<i32>} : memref<16x128xbf16, #tpu.memory_space<vmem>>, vector<16x128xbf16>,
    return
  }
  func.func @transform_0(%arg0: i32) -> (i32, i32) {
    %c0_i32 = arith.constant 0 : i32
    %c0_i32_0 = arith.constant 0 : i32
    return %arg0, %c0_i32 : i32, i32
  }
  func.func @transform_1(%arg0: i32) -> (i32, i32) {
    %c0_i32 = arith.constant 0 : i32
    %c0_i32_0 = arith.constant 0 : i32
    %c0_i32_1 = arith.constant 0 : i32
    return %c0_i32, %c0_i32_0 : i32, i32
  }
  func.func @transform_2(%arg0: i32) -> (i32, i32) {
    %c0_i32 = arith.constant 0 : i32
    %c0_i32_0 = arith.constant 0 : i32
    return %arg0, %c0_i32 : i32, i32
  }
}

</mosaic_0001>

<llo_original>
// kernel: tpu_custom_call.1
$region0: #{tpu_custom_call.1}
  #allocation0 [shape = 'u32[]', space=smem, size = 0x4, offset = 0x4, fixed_abs, tag = 'smem constant byte address 0x4 - core index']
  #allocation1 [shape = 'u32[144,128]{1,0:T(1,128)}', space=vmem, size = 0x12000, scoped, tag = 'internal scratch']
  %s0 = inlined_call_operand.hbm [shape: bf16[16,128], index: 0, kind: input, shape index: {}]
  %s1 = inlined_call_operand.hbm [shape: bf16[128,128], index: 1, kind: input, shape index: {}]
  %s2 = inlined_call_operand.hbm [shape: bf16[16,128], index: 2, kind: output, shape index: {}]
  %s3 = sld [smem:[#allocation0]]
  $region26: #{tpu_custom_call.1} parent=0
    _
  %s5 = ssub.s32 1, %s3
  %s6 = scalar_select 0, %s5, %s3
  $region1: #{tpu_custom_call.1} parent=0
    #allocation2 [shape = 'u8[4096]{0}', space=vmem, size = 0x1000, scoped, tag = 'input window, operand 0, single buffered']
    #allocation3 [shape = 's32[1]{0}', space=sflag, size = 0x4, scoped, tag = 'scoped memory for tpu_custom_call.1']
    #allocation4 [shape = 's32[1]{0}', space=sflag, size = 0x4, scoped, tag = 'scoped memory for tpu_custom_call.1']
    #allocation5 [shape = 'u8[32768]{0}', space=vmem, size = 0x8000, scoped, tag = 'input window, operand 1, single buffered']
    #allocation6 [shape = 's32[1]{0}', space=sflag, size = 0x4, scoped, tag = 'scoped memory for tpu_custom_call.1']
    #allocation7 [shape = 'u8[4096]{0}', space=vmem, size = 0x1000, scoped, tag = 'output window, operand 0, single buffered']
    %7 = vsyncpa [#allocation3], 0
    %8 = vsyncpa [#allocation6], 0
    %9 = vsyncpa [#allocation4], 0
    // Predicated region
    $region2: #{tpu_custom_call.1} parent=1 // pred_check
      _
    $region3: #{tpu_custom_call.1} parent=1 // pred_check_branch
      %11 = sbr.rel (0) target = $region5
    $region4: #{tpu_custom_call.1} parent=1 // pred_region
      %s13 = ssub.s32 128, 128
      %14 = vsyncadd [#allocation3], %s13
      %s15 = sshll.u32 [#allocation2], 4
      %s16 = int_to_ptr.vmem [resolvable:$true] %s15
      %21 = dma.hbm_to_vmem [thread:$0]  %s0, 128, %s16, [#allocation3], 64, 64, 4
    $region5: #{tpu_custom_call.1} parent=1 // pred_fallthru
      _
    // Predicated region
    $region6: #{tpu_custom_call.1} parent=1 // pred_check
      _
    $region7: #{tpu_custom_call.1} parent=1 // pred_check_branch
      %23 = sbr.rel (0) target = $region9
    $region8: #{tpu_custom_call.1} parent=1 // pred_region
      %s25 = ssub.s32 1024, 1024
      %26 = vsyncadd [#allocation6], %s25
      %s27 = sshll.u32 [#allocation5], 4
      %s28 = int_to_ptr.vmem [resolvable:$true] %s27
      %33 = dma.hbm_to_vmem [thread:$0]  %s1, 1024, %s28, [#allocation6], 64, 64, 4
    $region9: #{tpu_custom_call.1} parent=1 // pred_fallthru
      _
    // Predicated region
    $region10: #{tpu_custom_call.1} parent=1 // pred_check
      _
    $region11: #{tpu_custom_call.1} parent=1 // pred_check_branch
      %35 = sbr.rel (0) target = $region13
    $region12: #{tpu_custom_call.1} parent=1 // pred_region
      %36 = dma.done [#allocation3], 128
    $region13: #{tpu_custom_call.1} parent=1 // pred_fallthru
      _
    // Predicated region
    $region14: #{tpu_custom_call.1} parent=1 // pred_check
      _
    $region15: #{tpu_custom_call.1} parent=1 // pred_check_branch
      %38 = sbr.rel (0) target = $region17
    $region16: #{tpu_custom_call.1} parent=1 // pred_region
      %39 = dma.done [#allocation6], 1024
    $region17: #{tpu_custom_call.1} parent=1 // pred_fallthru
      _
    %v41 = vld [vmem:[#allocation2] sm:$0xf]
    %v42 = vld [vmem:[#allocation2 + $0x4] sm:$0xf]
    %v43 = vld [vmem:[#allocation5] sm:$0xf]
    %v44 = vld [vmem:[#allocation5 + $0x4] sm:$0xf]
    %v45 = vld [vmem:[#allocation5 + $0x8] sm:$0xf]
    %v46 = vld [vmem:[#allocation5 + $0xc] sm:$0xf]
    %v47 = vld [vmem:[#allocation5 + $0x10] sm:$0xf]
    %v48 = vld [vmem:[#allocation5 + $0x14] sm:$0xf]
    %v49 = vld [vmem:[#allocation5 + $0x18] sm:$0xf]
    %v50 = vld [vmem:[#allocation5 + $0x1c] sm:$0xf]
    %v51 = vld [vmem:[#allocation5 + $0x20] sm:$0xf]
    %v52 = vld [vmem:[#allocation5 + $0x24] sm:$0xf]
    %v53 = vld [vmem:[#allocation5 + $0x28] sm:$0xf]
    %v54 = vld [vmem:[#allocation5 + $0x2c] sm:$0xf]
    %v55 = vld [vmem:[#allocation5 + $0x30] sm:$0xf]
    %v56 = vld [vmem:[#allocation5 + $0x34] sm:$0xf]
    %v57 = vld [vmem:[#allocation5 + $0x38] sm:$0xf]
    %v58 = vld [vmem:[#allocation5 + $0x3c] sm:$0xf]
    %v61 = vunpack.c.l.b16 %v41
    %v62 = vunpack.c.l.b16 %v42
    %v63 = vpack.c.b16 %v62, %v61
    %v81 = vunpack.c.l.b16 %v43
    %v82 = vunpack.c.l.b16 %v44
    %v83 = vunpack.c.l.b16 %v45
    %v84 = vunpack.c.l.b16 %v46
    %v85 = vunpack.c.l.b16 %v47
    %v86 = vunpack.c.l.b16 %v48
    %v87 = vunpack.c.l.b16 %v49
    %v88 = vunpack.c.l.b16 %v50
    %v89 = vunpack.c.l.b16 %v51
    %v90 = vunpack.c.l.b16 %v52
    %v91 = vunpack.c.l.b16 %v53
    %v92 = vunpack.c.l.b16 %v54
    %v93 = vunpack.c.l.b16 %v55
    %v94 = vunpack.c.l.b16 %v56
    %v95 = vunpack.c.l.b16 %v57
    %v96 = vunpack.c.l.b16 %v58
    %v97 = vpack.c.b16 %v82, %v81
    %v98 = vpack.c.b16 %v84, %v83
    %v99 = vpack.c.b16 %v86, %v85
    %v100 = vpack.c.b16 %v88, %v87
    %v101 = vpack.c.b16 %v90, %v89
    %v102 = vpack.c.b16 %v92, %v91
    %v103 = vpack.c.b16 %v94, %v93
    %v104 = vpack.c.b16 %v96, %v95
    %113 = vmatprep.subr.bf16.mxu0 0
    %114 = vmatpush1.bf16.msra.mxu0 %v104
    %115 = vmatprep.subr.bf16.mxu0 0
    %116 = vmatpush1.bf16.msra.mxu0 %v103
    %117 = vmatprep.subr.bf16.mxu0 0
    %118 = vmatpush1.bf16.msra.mxu0 %v102
    %119 = vmatprep.subr.bf16.mxu0 0
    %120 = vmatpush1.bf16.msra.mxu0 %v101
    %121 = vmatprep.subr.bf16.mxu0 0
    %122 = vmatpush1.bf16.msra.mxu0 %v100
    %123 = vmatprep.subr.bf16.mxu0 0
    %124 = vmatpush1.bf16.msra.mxu0 %v99
    %125 = vmatprep.subr.bf16.mxu0 0
    %126 = vmatpush1.bf16.msra.mxu0 %v98
    %127 = vmatprep.subr.bf16.mxu0 0
    %128 = vmatpush1.bf16.msra.mxu0 %v97
    %129 = vmatprep.subr.bf16.mxu0 0
    %130 = vmatpush2.bf16.msra.mxu0 0
    %131 = vmatprep.subr.bf16.mxu0 0
    %132 = vmatpush2.bf16.msra.mxu0 0
    %133 = vmatprep.subr.bf16.mxu0 0
    %134 = vmatpush2.bf16.msra.mxu0 0
    %135 = vmatprep.subr.bf16.mxu0 0
    %136 = vmatpush2.bf16.msra.mxu0 0
    %137 = vmatprep.subr.bf16.mxu0 0
    %138 = vmatpush2.bf16.msra.mxu0 0
    %139 = vmatprep.subr.bf16.mxu0 0
    %140 = vmatpush2.bf16.msra.mxu0 0
    %141 = vmatprep.subr.bf16.mxu0 0
    %142 = vmatpush2.bf16.msra.mxu0 0
    %143 = vmatprep.subr.bf16.mxu0 0
    %144 = vmatpush2.bf16.msra.mxu0 0
    %145 = vmatprep.mubr.bf16.mxu0 0
    %146 = vmatmul.mubr.bf16.gmra.mxu0 %v63
    %v147 = vpop.f32.mrf.mxu0
    %v148 = vadd.f32 0.0, %v147
    %v149 = vpop.f32.mrf.mxu0
    %v150 = vpop.f32.mrf.mxu0
    %v151 = vadd.f32 0.0, %v150
    %v152 = vpop.f32.mrf.mxu0
    %153 = vdwg.mxu0
    %v154 = vpack.c.bf16 %v151, %v148
    %v156 = vunpack.c.l.b16 %v154
    %v157 = vunpack.c.h.b16 %v154
    %v158 = vpack.c.b16 %v156, %v156
    %v159 = vpack.c.b16 %v157, %v157
    %162 = vst [vmem:[#allocation7] sm:$0xf] %v158
    %163 = vst [vmem:[#allocation7 + $0x4] sm:$0xf] %v159
    // Predicated region
    $region18: #{tpu_custom_call.1} parent=1 // pred_check
      _
    $region19: #{tpu_custom_call.1} parent=1 // pred_check_branch
      %165 = sbr.rel (0) target = $region21
    $region20: #{tpu_custom_call.1} parent=1 // pred_region
      %s167 = ssub.s32 128, 128
      %168 = vsyncadd [#allocation4], %s167
      %s169 = sshll.u32 [#allocation7], 4
      %s170 = int_to_ptr.vmem [resolvable:$true] %s169
      %175 = dma.vmem_to_hbm [thread:$0]  %s170, 128, %s2, [#allocation4], 64, 64, 4
    $region21: #{tpu_custom_call.1} parent=1 // pred_fallthru
      _
    // Predicated region
    $region22: #{tpu_custom_call.1} parent=1 // pred_check
      _
    $region23: #{tpu_custom_call.1} parent=1 // pred_check_branch
      %177 = sbr.rel (0) target = $region25
    $region24: #{tpu_custom_call.1} parent=1 // pred_region
      %178 = dma.done [#allocation4], 128
    $region25: #{tpu_custom_call.1} parent=1 // pred_fallthru
      _
    %179 = vsyncpa [#allocation3], 1
    %180 = vsyncpa [#allocation6], 1
    %181 = vsyncpa [#allocation4], 1

</llo_original>
